<compile_context>
chip_gen: v6e
topology: v6e:2x2x1
jax: 0.10.0
libtpu: 0.0.40
codegen_flags: <defaults>
</compile_context>

<pallas_src>
import functools

import jax
import jax.numpy as jnp
from jax.experimental import pallas as pl
from jax.experimental.pallas import tpu as pltpu


FEAT_PAD = 128  # lane width; every layer's in/out features are padded to this


def _round_up(x, m):
    return ((x + m - 1) // m) * m


def _mlp_kernel(n_layers, x_ref, p_ref, o_ref):
    """Fused MLP forward for one batch tile.

    x_ref : (TB, 128)            padded input, col 127 == 1 (bias lane)
    p_ref : (n_layers, 128, 128) packed weights (bias folded into row 127)
    o_ref : (TB, 128)            lane-dense output slab (col 0 is the real logit)

    Matches [Linear, ReLU] * n_layers + [Linear, Sigmoid].
    """
    h = x_ref[...]
    for layer in range(n_layers):
        w = p_ref[layer]  # (128, 128), VMEM-resident
        h = jnp.dot(h, w, preferred_element_type=jnp.float32)
        if layer < n_layers - 1:
            h = jnp.maximum(h, 0.0)                          # ReLU (VPU)
        else:
            # sigmoid: exp + approx reciprocal both run on the EUP slot
            h = pl.reciprocal(1.0 + jnp.exp(-h), approx=True)
    o_ref[...] = h.astype(o_ref.dtype)


def _pack_params(weights, biases, feat_pad=FEAT_PAD):
    """Pack all layers into one (L, feat_pad, feat_pad) buffer.

    For layer i:
      rows 0..in_i-1, cols 0..out_i-1  -> W_i
      row  feat_pad-1, cols 0..out_i-1 -> b_i   (hit by the constant-1 lane)
      (feat_pad-1, feat_pad-1) = 1.0 for non-final layers so the constant-1
      lane propagates through ReLU to the next layer.
    """
    n_layers = len(weights)
    blocks = []
    for i, (w, b) in enumerate(zip(weights, biases)):
        d_in, d_out = w.shape
        blk = jnp.zeros((feat_pad, feat_pad), jnp.float32)
        blk = blk.at[:d_in, :d_out].set(w.astype(jnp.float32))
        blk = blk.at[feat_pad - 1, :d_out].set(b.astype(jnp.float32))
        if i < n_layers - 1:
            blk = blk.at[feat_pad - 1, feat_pad - 1].set(1.0)
        blocks.append(blk)
    return jnp.stack(blocks, axis=0)


def _pad_input(x, batch_pad, feat_pad=FEAT_PAD):
    b, d = x.shape
    xp = jnp.zeros((batch_pad, feat_pad), jnp.float32)
    xp = xp.at[:b, :d].set(x.astype(jnp.float32))
    xp = xp.at[:b, feat_pad - 1].set(1.0)  # constant-1 lane (bias fold)
    return xp


def mlp_forward(x, weights, biases, *, block_batch=None):
    """Fused Pallas MLP forward. weights[i]: (in_i, out_i), biases[i]: (out_i,)."""
    batch = x.shape[0]
    n_layers = len(weights)

    # Batch tile: amortize per-step overhead; weights stay VMEM-resident.
    if block_batch is None:
        block_batch = min(256, _round_up(batch, 8))
    batch_pad = _round_up(batch, block_batch)
    grid = (batch_pad // block_batch,)

    xp = _pad_input(x, batch_pad)                      # (batch_pad, 128)
    params = _pack_params(weights, biases)             # (n_layers, 128, 128)

    cost = pl.CostEstimate(
        flops=2 * batch_pad * FEAT_PAD * FEAT_PAD * n_layers,
        transcendentals=batch_pad * FEAT_PAD,
        bytes_accessed=(xp.size + params.size + batch_pad * FEAT_PAD) * 4,
    )

    out = pl.pallas_call(
        functools.partial(_mlp_kernel, n_layers),
        out_shape=jax.ShapeDtypeStruct((batch_pad, FEAT_PAD), jnp.float32),
        grid=grid,
        in_specs=[
            # x: tiled over batch
            pl.BlockSpec((block_batch, FEAT_PAD), lambda i: (i, 0)),
            # packed params: constant block index -> one DMA, VMEM-resident
            pl.BlockSpec((n_layers, FEAT_PAD, FEAT_PAD), lambda i: (0, 0, 0)),
        ],
        out_specs=pl.BlockSpec((block_batch, FEAT_PAD), lambda i: (i, 0)),
        compiler_params=pltpu.CompilerParams(
            dimension_semantics=("parallel",),
        ),
        cost_estimate=cost,
    )(xp, params)

    # Slice the single real output column (and drop batch padding) in JAX.
    return out[:batch, :1]


def init_params(key, seq_len, dimensions):
    """Deterministic init mimicking nn.Linear default (uniform +/- 1/sqrt(fan_in))."""
    dims_in = [seq_len] + list(dimensions)
    dims_out = list(dimensions) + [1]
    weights, biases = [], []
    for d_in, d_out in zip(dims_in, dims_out):
        key, kw, kb = jax.random.split(key, 3)
        bound = 1.0 / (d_in ** 0.5)
        weights.append(jax.random.uniform(kw, (d_in, d_out), jnp.float32, -bound, bound))
        biases.append(jax.random.uniform(kb, (d_out,), jnp.float32, -bound, bound))
    return weights, biases


def reference_forward(x, weights, biases):
    h = x
    for i, (w, b) in enumerate(zip(weights, biases)):
        h = h @ w + b
        if i < len(weights) - 1:
            h = jnp.maximum(h, 0.0)
        else:
            h = jax.nn.sigmoid(h)
    return h


if __name__ == "__main__":
    # Module config: model_params = {'dimensions': [32, 32], 'n_layers': 2}
    seq_len = 9
    dimensions = [32, 32]

    key = jax.random.PRNGKey(0)
    key, kp = jax.random.split(key)
    weights, biases = init_params(kp, seq_len, dimensions)

    # Small case (batch=8): single grid step.
    key, kx = jax.random.split(key)
    x_small = jax.random.normal(kx, (8, seq_len), dtype=jnp.float32)
    out_small = jax.block_until_ready(mlp_forward(x_small, weights, biases))
    ref_small = reference_forward(x_small, weights, biases)
    assert out_small.shape == (8, 1), out_small.shape
    assert jnp.allclose(out_small, ref_small, atol=2e-3, rtol=2e-3)

    # Larger case (batch=300): exercises batch tiling + row padding.
    key, kx2 = jax.random.split(key)
    x_big = jax.random.normal(kx2, (300, seq_len), dtype=jnp.float32)
    out_big = jax.block_until_ready(mlp_forward(x_big, weights, biases))
    ref_big = reference_forward(x_big, weights, biases)
    assert out_big.shape == (300, 1), out_big.shape
    assert jnp.allclose(out_big, ref_big, atol=2e-3, rtol=2e-3)

    print("KERNEL_OK")
</pallas_src>

<mosaic_0001>
module attributes {stable_mosaic.version = 11 : i64} {
  func.func @_mlp_kernel(%arg0: i32, %arg1: memref<8x128xf32, #tpu.memory_space<vmem>>, %arg2: memref<3x128x128xf32, #tpu.memory_space<vmem>>, %arg3: memref<8x128xf32, #tpu.memory_space<vmem>>) attributes {dimension_semantics = [#tpu.dimension_semantics<parallel>], iteration_bounds = array<i64: 1>, scalar_prefetch = 0 : i64, scratch_operands = 0 : i64, tpu.core_type = #tpu.core_type<tc>, window_params = [{transform_indices = @transform_0, window_bounds = array<i64: 8, 128>}, {pipeline_mode = #tpu.pipeline_mode<synchronous>, transform_indices = @transform_1, window_bounds = array<i64: 3, 128, 128>}, {transform_indices = @transform_2, window_bounds = array<i64: 8, 128>}]} {
    %c0 = arith.constant 0 : index
    %c0_0 = arith.constant 0 : index
    %0 = vector.load %arg1[%c0, %c0_0] : memref<8x128xf32, #tpu.memory_space<vmem>>, vector<8x128xf32>
    %c0_1 = arith.constant 0 : index
    %c0_2 = arith.constant 0 : index
    %c0_3 = arith.constant 0 : index
    %1 = vector.load %arg2[%c0_1, %c0_2, %c0_3] : memref<3x128x128xf32, #tpu.memory_space<vmem>>, vector<1x128x128xf32>
    %2 = vector.shape_cast %1 : vector<1x128x128xf32> to vector<128x128xf32>
    %cst = arith.constant dense<0.000000e+00> : vector<8x128xf32>
    %3 = tpu.matmul %0, %2, %cst {dimension_numbers = #tpu.dot_dimension_numbers<[1], [0], [0], [1], [0, 0, 1, 1], [], []>} : vector<8x128xf32>, vector<128x128xf32>, vector<8x128xf32> -> vector<8x128xf32>
    %cst_4 = arith.constant 0.000000e+00 : f32
    %4 = vector.broadcast %cst_4 : f32 to vector<8x128xf32>
    %5 = arith.maximumf %3, %4 : vector<8x128xf32>
    %c1 = arith.constant 1 : index
    %c0_5 = arith.constant 0 : index
    %c0_6 = arith.constant 0 : index
    %6 = vector.load %arg2[%c1, %c0_5, %c0_6] : memref<3x128x128xf32, #tpu.memory_space<vmem>>, vector<1x128x128xf32>
    %7 = vector.shape_cast %6 : vector<1x128x128xf32> to vector<128x128xf32>
    %cst_7 = arith.constant dense<0.000000e+00> : vector<8x128xf32>
    %8 = tpu.matmul %5, %7, %cst_7 {dimension_numbers = #tpu.dot_dimension_numbers<[1], [0], [0], [1], [0, 0, 1, 1], [], []>} : vector<8x128xf32>, vector<128x128xf32>, vector<8x128xf32> -> vector<8x128xf32>
    %cst_8 = arith.constant 0.000000e+00 : f32
    %9 = vector.broadcast %cst_8 : f32 to vector<8x128xf32>
    %10 = arith.maximumf %8, %9 : vector<8x128xf32>
    %c2 = arith.constant 2 : index
    %c0_9 = arith.constant 0 : index
    %c0_10 = arith.constant 0 : index
    %11 = vector.load %arg2[%c2, %c0_9, %c0_10] : memref<3x128x128xf32, #tpu.memory_space<vmem>>, vector<1x128x128xf32>
    %12 = vector.shape_cast %11 : vector<1x128x128xf32> to vector<128x128xf32>
    %cst_11 = arith.constant dense<0.000000e+00> : vector<8x128xf32>
    %13 = tpu.matmul %10, %12, %cst_11 {dimension_numbers = #tpu.dot_dimension_numbers<[1], [0], [0], [1], [0, 0, 1, 1], [], []>} : vector<8x128xf32>, vector<128x128xf32>, vector<8x128xf32> -> vector<8x128xf32>
    %cst_12 = arith.constant 0.000000e+00 : f32
    %14 = vector.broadcast %cst_12 : f32 to vector<8x128xf32>
    %15 = arith.subf %14, %13 : vector<8x128xf32>
    %16 = math.exp %15 : vector<8x128xf32>
    %cst_13 = arith.constant 1.000000e+00 : f32
    %17 = vector.broadcast %cst_13 : f32 to vector<8x128xf32>
    %18 = arith.addf %17, %16 : vector<8x128xf32>
    %19 = tpu.reciprocal %18 {approx = true} : vector<8x128xf32> -> vector<8x128xf32>
    %c0_14 = arith.constant 0 : index
    %c0_15 = arith.constant 0 : index
    %20 = vector.load %arg3[%c0_14, %c0_15] : memref<8x128xf32, #tpu.memory_space<vmem>>, vector<8x128xf32>
    tpu.vector_store %arg3[%c0_14, %c0_15], %19 {strides = array<i32>} : memref<8x128xf32, #tpu.memory_space<vmem>>, vector<8x128xf32>,
    return
  }
  func.func @transform_0(%arg0: i32) -> (i32, i32) {
    %c0_i32 = arith.constant 0 : i32
    %c0_i32_0 = arith.constant 0 : i32
    return %arg0, %c0_i32 : i32, i32
  }
  func.func @transform_1(%arg0: i32) -> (i32, i32, i32) {
    %c0_i32 = arith.constant 0 : i32
    %c0_i32_0 = arith.constant 0 : i32
    %c0_i32_1 = arith.constant 0 : i32
    %c0_i32_2 = arith.constant 0 : i32
    return %c0_i32, %c0_i32_0, %c0_i32_1 : i32, i32, i32
  }
  func.func @transform_2(%arg0: i32) -> (i32, i32) {
    %c0_i32 = arith.constant 0 : i32
    %c0_i32_0 = arith.constant 0 : i32
    return %arg0, %c0_i32 : i32, i32
  }
}

</mosaic_0001>

<llo_original>
// kernel: tpu_custom_call.1
$region0: #{tpu_custom_call.1}
  #allocation0 [shape = 'u32[]', space=smem, size = 0x4, offset = 0x4, fixed_abs, tag = 'smem constant byte address 0x4 - core index']
  #allocation1 [shape = 'u32[144,128]{1,0:T(1,128)}', space=vmem, size = 0x12000, scoped, tag = 'internal scratch']
  %s0 = inlined_call_operand.hbm [shape: f32[8,128], index: 0, kind: input, shape index: {}]
  %s1 = inlined_call_operand.hbm [shape: f32[3,128,128], index: 1, kind: input, shape index: {}]
  %s2 = inlined_call_operand.hbm [shape: f32[8,128], index: 2, kind: output, shape index: {}]
  %s3 = sld [smem:[#allocation0]]
  $region26: #{tpu_custom_call.1} parent=0
    _
  %s5 = ssub.s32 1, %s3
  %s6 = scalar_select 0, %s5, %s3
  $region1: #{tpu_custom_call.1} parent=0
    #allocation2 [shape = 'u8[4096]{0}', space=vmem, size = 0x1000, scoped, tag = 'input window, operand 0, single buffered']
    #allocation3 [shape = 's32[1]{0}', space=sflag, size = 0x4, scoped, tag = 'scoped memory for tpu_custom_call.1']
    #allocation4 [shape = 's32[1]{0}', space=sflag, size = 0x4, scoped, tag = 'scoped memory for tpu_custom_call.1']
    #allocation5 [shape = 'u8[196608]{0}', space=vmem, size = 0x30000, scoped, tag = 'input window, operand 1, single buffered']
    #allocation6 [shape = 's32[1]{0}', space=sflag, size = 0x4, scoped, tag = 'scoped memory for tpu_custom_call.1']
    #allocation7 [shape = 'u8[4096]{0}', space=vmem, size = 0x1000, scoped, tag = 'output window, operand 0, single buffered']
    %7 = vsyncpa [#allocation3], 0
    %8 = vsyncpa [#allocation6], 0
    %9 = vsyncpa [#allocation4], 0
    // Predicated region
    $region2: #{tpu_custom_call.1} parent=1 // pred_check
      _
    $region3: #{tpu_custom_call.1} parent=1 // pred_check_branch
      %11 = sbr.rel (0) target = $region5
    $region4: #{tpu_custom_call.1} parent=1 // pred_region
      %s13 = ssub.s32 128, 128
      %14 = vsyncadd [#allocation3], %s13
      %s16 = sshll.u32 [#allocation2], 4
      %s17 = int_to_ptr.vmem [resolvable:$true] %s16
      %19 = dma.hbm_to_vmem [thread:$0]  %s0, 128, %s17, [#allocation3]
    $region5: #{tpu_custom_call.1} parent=1 // pred_fallthru
      _
    // Predicated region
    $region6: #{tpu_custom_call.1} parent=1 // pred_check
      _
    $region7: #{tpu_custom_call.1} parent=1 // pred_check_branch
      %21 = sbr.rel (0) target = $region9
    $region8: #{tpu_custom_call.1} parent=1 // pred_region
      %s23 = ssub.s32 6144, 6144
      %24 = vsyncadd [#allocation6], %s23
      %s25 = sshll.u32 [#allocation5], 4
      %s26 = int_to_ptr.vmem [resolvable:$true] %s25
      %31 = dma.hbm_to_vmem [thread:$0]  %s1, 6144, %s26, [#allocation6], 128, 128, 8
    $region9: #{tpu_custom_call.1} parent=1 // pred_fallthru
      _
    // Predicated region
    $region10: #{tpu_custom_call.1} parent=1 // pred_check
      _
    $region11: #{tpu_custom_call.1} parent=1 // pred_check_branch
      %33 = sbr.rel (0) target = $region13
    $region12: #{tpu_custom_call.1} parent=1 // pred_region
      %34 = dma.done [#allocation3], 128
    $region13: #{tpu_custom_call.1} parent=1 // pred_fallthru
      _
    // Predicated region
    $region14: #{tpu_custom_call.1} parent=1 // pred_check
      _
    $region15: #{tpu_custom_call.1} parent=1 // pred_check_branch
      %36 = sbr.rel (0) target = $region17
    $region16: #{tpu_custom_call.1} parent=1 // pred_region
      %37 = dma.done [#allocation6], 6144
    $region17: #{tpu_custom_call.1} parent=1 // pred_fallthru
      _
    %v38 = vld [vmem:[#allocation2] sm:$0xff]
    %v39 = vld [vmem:[#allocation5] sm:$0xff]
    %v40 = vld [vmem:[#allocation5 + $0x8] sm:$0xff]
    %v41 = vld [vmem:[#allocation5 + $0x10] sm:$0xff]
    %v42 = vld [vmem:[#allocation5 + $0x18] sm:$0xff]
    %v43 = vld [vmem:[#allocation5 + $0x20] sm:$0xff]
    %v44 = vld [vmem:[#allocation5 + $0x28] sm:$0xff]
    %v45 = vld [vmem:[#allocation5 + $0x30] sm:$0xff]
    %v46 = vld [vmem:[#allocation5 + $0x38] sm:$0xff]
    %v47 = vld [vmem:[#allocation5 + $0x40] sm:$0xff]
    %v48 = vld [vmem:[#allocation5 + $0x48] sm:$0xff]
    %v49 = vld [vmem:[#allocation5 + $0x50] sm:$0xff]
    %v50 = vld [vmem:[#allocation5 + $0x58] sm:$0xff]
    %v51 = vld [vmem:[#allocation5 + $0x60] sm:$0xff]
    %v52 = vld [vmem:[#allocation5 + $0x68] sm:$0xff]
    %v53 = vld [vmem:[#allocation5 + $0x70] sm:$0xff]
    %v54 = vld [vmem:[#allocation5 + $0x78] sm:$0xff]
    %55 = vmatprep.subr.mxu0 0.0
    %56 = vmatpush1.msra.mxu0 %v54
    %57 = vmatprep.subr.mxu0 0.0
    %58 = vmatpush1.msra.mxu0 %v53
    %59 = vmatprep.subr.mxu0 0.0
    %60 = vmatpush1.msra.mxu0 %v52
    %61 = vmatprep.subr.mxu0 0.0
    %62 = vmatpush1.msra.mxu0 %v51
    %63 = vmatprep.subr.mxu0 0.0
    %64 = vmatpush1.msra.mxu0 %v50
    %65 = vmatprep.subr.mxu0 0.0
    %66 = vmatpush1.msra.mxu0 %v49
    %67 = vmatprep.subr.mxu0 0.0
    %68 = vmatpush1.msra.mxu0 %v48
    %69 = vmatprep.subr.mxu0 0.0
    %70 = vmatpush1.msra.mxu0 %v47
    %71 = vmatprep.subr.mxu0 0.0
    %72 = vmatpush1.msra.mxu0 %v46
    %73 = vmatprep.subr.mxu0 0.0
    %74 = vmatpush1.msra.mxu0 %v45
    %75 = vmatprep.subr.mxu0 0.0
    %76 = vmatpush1.msra.mxu0 %v44
    %77 = vmatprep.subr.mxu0 0.0
    %78 = vmatpush1.msra.mxu0 %v43
    %79 = vmatprep.subr.mxu0 0.0
    %80 = vmatpush1.msra.mxu0 %v42
    %81 = vmatprep.subr.mxu0 0.0
    %82 = vmatpush1.msra.mxu0 %v41
    %83 = vmatprep.subr.mxu0 0.0
    %84 = vmatpush1.msra.mxu0 %v40
    %85 = vmatprep.subr.mxu0 0.0
    %86 = vmatpush1.msra.mxu0 %v39
    %87 = vmatprep.subr.mxu0 0.0
    %88 = vmatpush2.msra.mxu0 0.0
    %89 = vmatprep.subr.mxu0 0.0
    %90 = vmatpush2.msra.mxu0 0.0
    %91 = vmatprep.subr.mxu0 0.0
    %92 = vmatpush2.msra.mxu0 0.0
    %93 = vmatprep.subr.mxu0 0.0
    %94 = vmatpush2.msra.mxu0 0.0
    %95 = vmatprep.subr.mxu0 0.0
    %96 = vmatpush2.msra.mxu0 0.0
    %97 = vmatprep.subr.mxu0 0.0
    %98 = vmatpush2.msra.mxu0 0.0
    %99 = vmatprep.subr.mxu0 0.0
    %100 = vmatpush2.msra.mxu0 0.0
    %101 = vmatprep.subr.mxu0 0.0
    %102 = vmatpush2.msra.mxu0 0.0
    %103 = vmatprep.subr.mxu0 0.0
    %104 = vmatpush2.msra.mxu0 0.0
    %105 = vmatprep.subr.mxu0 0.0
    %106 = vmatpush2.msra.mxu0 0.0
    %107 = vmatprep.subr.mxu0 0.0
    %108 = vmatpush2.msra.mxu0 0.0
    %109 = vmatprep.subr.mxu0 0.0
    %110 = vmatpush2.msra.mxu0 0.0
    %111 = vmatprep.subr.mxu0 0.0
    %112 = vmatpush2.msra.mxu0 0.0
    %113 = vmatprep.subr.mxu0 0.0
    %114 = vmatpush2.msra.mxu0 0.0
    %115 = vmatprep.subr.mxu0 0.0
    %116 = vmatpush2.msra.mxu0 0.0
    %117 = vmatprep.subr.mxu0 0.0
    %118 = vmatpush2.msra.mxu0 0.0
    %119 = vmatprep.mubr.f32.mxu0 0.0
    %120 = vmatmul.mubr.f32.gmra.mxu0 %v38
    %v121 = vpop.f32.mrf.mxu0
    %v122 = vadd.f32 0.0, %v121
    %v123 = vpop.f32.mrf.mxu0
    %124 = vdwg.mxu0
    %v125 = vmax.f32 %v122, 0.0
    %s126 = scalar_lea.vmem [#allocation5], 128
    %v127 = vld [vmem:[%s126] sm:$0xff]
    %v128 = vld [vmem:[%s126 + $0x8] sm:$0xff]
    %v129 = vld [vmem:[%s126 + $0x10] sm:$0xff]
    %v130 = vld [vmem:[%s126 + $0x18] sm:$0xff]
    %v131 = vld [vmem:[%s126 + $0x20] sm:$0xff]
    %v132 = vld [vmem:[%s126 + $0x28] sm:$0xff]
    %v133 = vld [vmem:[%s126 + $0x30] sm:$0xff]
    %v134 = vld [vmem:[%s126 + $0x38] sm:$0xff]
    %v135 = vld [vmem:[%s126 + $0x40] sm:$0xff]
    %v136 = vld [vmem:[%s126 + $0x48] sm:$0xff]
    %v137 = vld [vmem:[%s126 + $0x50] sm:$0xff]
    %v138 = vld [vmem:[%s126 + $0x58] sm:$0xff]
    %v139 = vld [vmem:[%s126 + $0x60] sm:$0xff]
    %v140 = vld [vmem:[%s126 + $0x68] sm:$0xff]
    %v141 = vld [vmem:[%s126 + $0x70] sm:$0xff]
    %v142 = vld [vmem:[%s126 + $0x78] sm:$0xff]
    %143 = vmatprep.subr.mxu0 0.0
    %144 = vmatpush1.msra.mxu0 %v142
    %145 = vmatprep.subr.mxu0 0.0
    %146 = vmatpush1.msra.mxu0 %v141
    %147 = vmatprep.subr.mxu0 0.0
    %148 = vmatpush1.msra.mxu0 %v140
    %149 = vmatprep.subr.mxu0 0.0
    %150 = vmatpush1.msra.mxu0 %v139
    %151 = vmatprep.subr.mxu0 0.0
    %152 = vmatpush1.msra.mxu0 %v138
    %153 = vmatprep.subr.mxu0 0.0
    %154 = vmatpush1.msra.mxu0 %v137
    %155 = vmatprep.subr.mxu0 0.0
    %156 = vmatpush1.msra.mxu0 %v136
    %157 = vmatprep.subr.mxu0 0.0
    %158 = vmatpush1.msra.mxu0 %v135
    %159 = vmatprep.subr.mxu0 0.0
    %160 = vmatpush1.msra.mxu0 %v134
    %161 = vmatprep.subr.mxu0 0.0
    %162 = vmatpush1.msra.mxu0 %v133
    %163 = vmatprep.subr.mxu0 0.0
    %164 = vmatpush1.msra.mxu0 %v132
    %165 = vmatprep.subr.mxu0 0.0
    %166 = vmatpush1.msra.mxu0 %v131
    %167 = vmatprep.subr.mxu0 0.0
    %168 = vmatpush1.msra.mxu0 %v130
    %169 = vmatprep.subr.mxu0 0.0
    %170 = vmatpush1.msra.mxu0 %v129
    %171 = vmatprep.subr.mxu0 0.0
    %172 = vmatpush1.msra.mxu0 %v128
    %173 = vmatprep.subr.mxu0 0.0
    %174 = vmatpush1.msra.mxu0 %v127
    %175 = vmatprep.subr.mxu0 0.0
    %176 = vmatpush2.msra.mxu0 0.0
    %177 = vmatprep.subr.mxu0 0.0
    %178 = vmatpush2.msra.mxu0 0.0
    %179 = vmatprep.subr.mxu0 0.0
    %180 = vmatpush2.msra.mxu0 0.0
    %181 = vmatprep.subr.mxu0 0.0
    %182 = vmatpush2.msra.mxu0 0.0
    %183 = vmatprep.subr.mxu0 0.0
    %184 = vmatpush2.msra.mxu0 0.0
    %185 = vmatprep.subr.mxu0 0.0
    %186 = vmatpush2.msra.mxu0 0.0
    %187 = vmatprep.subr.mxu0 0.0
    %188 = vmatpush2.msra.mxu0 0.0
    %189 = vmatprep.subr.mxu0 0.0
    %190 = vmatpush2.msra.mxu0 0.0
    %191 = vmatprep.subr.mxu0 0.0
    %192 = vmatpush2.msra.mxu0 0.0
    %193 = vmatprep.subr.mxu0 0.0
    %194 = vmatpush2.msra.mxu0 0.0
    %195 = vmatprep.subr.mxu0 0.0
    %196 = vmatpush2.msra.mxu0 0.0
    %197 = vmatprep.subr.mxu0 0.0
    %198 = vmatpush2.msra.mxu0 0.0
    %199 = vmatprep.subr.mxu0 0.0
    %200 = vmatpush2.msra.mxu0 0.0
    %201 = vmatprep.subr.mxu0 0.0
    %202 = vmatpush2.msra.mxu0 0.0
    %203 = vmatprep.subr.mxu0 0.0
    %204 = vmatpush2.msra.mxu0 0.0
    %205 = vmatprep.subr.mxu0 0.0
    %206 = vmatpush2.msra.mxu0 0.0
    %207 = vmatprep.mubr.f32.mxu0 0.0
    %208 = vmatmul.mubr.f32.gmra.mxu0 %v125
    %v209 = vpop.f32.mrf.mxu0
    %v210 = vadd.f32 0.0, %v209
    %v211 = vpop.f32.mrf.mxu0
    %212 = vdwg.mxu0
    %v213 = vmax.f32 %v210, 0.0
    %s214 = scalar_lea.vmem [#allocation5], 256
    %v215 = vld [vmem:[%s214] sm:$0xff]
    %v216 = vld [vmem:[%s214 + $0x8] sm:$0xff]
    %v217 = vld [vmem:[%s214 + $0x10] sm:$0xff]
    %v218 = vld [vmem:[%s214 + $0x18] sm:$0xff]
    %v219 = vld [vmem:[%s214 + $0x20] sm:$0xff]
    %v220 = vld [vmem:[%s214 + $0x28] sm:$0xff]
    %v221 = vld [vmem:[%s214 + $0x30] sm:$0xff]
    %v222 = vld [vmem:[%s214 + $0x38] sm:$0xff]
    %v223 = vld [vmem:[%s214 + $0x40] sm:$0xff]
    %v224 = vld [vmem:[%s214 + $0x48] sm:$0xff]
    %v225 = vld [vmem:[%s214 + $0x50] sm:$0xff]
    %v226 = vld [vmem:[%s214 + $0x58] sm:$0xff]
    %v227 = vld [vmem:[%s214 + $0x60] sm:$0xff]
    %v228 = vld [vmem:[%s214 + $0x68] sm:$0xff]
    %v229 = vld [vmem:[%s214 + $0x70] sm:$0xff]
    %v230 = vld [vmem:[%s214 + $0x78] sm:$0xff]
    %231 = vmatprep.subr.mxu0 0.0
    %232 = vmatpush1.msra.mxu0 %v230
    %233 = vmatprep.subr.mxu0 0.0
    %234 = vmatpush1.msra.mxu0 %v229
    %235 = vmatprep.subr.mxu0 0.0
    %236 = vmatpush1.msra.mxu0 %v228
    %237 = vmatprep.subr.mxu0 0.0
    %238 = vmatpush1.msra.mxu0 %v227
    %239 = vmatprep.subr.mxu0 0.0
    %240 = vmatpush1.msra.mxu0 %v226
    %241 = vmatprep.subr.mxu0 0.0
    %242 = vmatpush1.msra.mxu0 %v225
    %243 = vmatprep.subr.mxu0 0.0
    %244 = vmatpush1.msra.mxu0 %v224
    %245 = vmatprep.subr.mxu0 0.0
    %246 = vmatpush1.msra.mxu0 %v223
    %247 = vmatprep.subr.mxu0 0.0
    %248 = vmatpush1.msra.mxu0 %v222
    %249 = vmatprep.subr.mxu0 0.0
    %250 = vmatpush1.msra.mxu0 %v221
    %251 = vmatprep.subr.mxu0 0.0
    %252 = vmatpush1.msra.mxu0 %v220
    %253 = vmatprep.subr.mxu0 0.0
    %254 = vmatpush1.msra.mxu0 %v219
    %255 = vmatprep.subr.mxu0 0.0
    %256 = vmatpush1.msra.mxu0 %v218
    %257 = vmatprep.subr.mxu0 0.0
    %258 = vmatpush1.msra.mxu0 %v217
    %259 = vmatprep.subr.mxu0 0.0
    %260 = vmatpush1.msra.mxu0 %v216
    %261 = vmatprep.subr.mxu0 0.0
    %262 = vmatpush1.msra.mxu0 %v215
    %263 = vmatprep.subr.mxu0 0.0
    %264 = vmatpush2.msra.mxu0 0.0
    %265 = vmatprep.subr.mxu0 0.0
    %266 = vmatpush2.msra.mxu0 0.0
    %267 = vmatprep.subr.mxu0 0.0
    %268 = vmatpush2.msra.mxu0 0.0
    %269 = vmatprep.subr.mxu0 0.0
    %270 = vmatpush2.msra.mxu0 0.0
    %271 = vmatprep.subr.mxu0 0.0
    %272 = vmatpush2.msra.mxu0 0.0
    %273 = vmatprep.subr.mxu0 0.0
    %274 = vmatpush2.msra.mxu0 0.0
    %275 = vmatprep.subr.mxu0 0.0
    %276 = vmatpush2.msra.mxu0 0.0
    %277 = vmatprep.subr.mxu0 0.0
    %278 = vmatpush2.msra.mxu0 0.0
    %279 = vmatprep.subr.mxu0 0.0
    %280 = vmatpush2.msra.mxu0 0.0
    %281 = vmatprep.subr.mxu0 0.0
    %282 = vmatpush2.msra.mxu0 0.0
    %283 = vmatprep.subr.mxu0 0.0
    %284 = vmatpush2.msra.mxu0 0.0
    %285 = vmatprep.subr.mxu0 0.0
    %286 = vmatpush2.msra.mxu0 0.0
    %287 = vmatprep.subr.mxu0 0.0
    %288 = vmatpush2.msra.mxu0 0.0
    %289 = vmatprep.subr.mxu0 0.0
    %290 = vmatpush2.msra.mxu0 0.0
    %291 = vmatprep.subr.mxu0 0.0
    %292 = vmatpush2.msra.mxu0 0.0
    %293 = vmatprep.subr.mxu0 0.0
    %294 = vmatpush2.msra.mxu0 0.0
    %295 = vmatprep.mubr.f32.mxu0 0.0
    %296 = vmatmul.mubr.f32.gmra.mxu0 %v213
    %v297 = vpop.f32.mrf.mxu0
    %v298 = vadd.f32 0.0, %v297
    %v299 = vpop.f32.mrf.mxu0
    %300 = vdwg.mxu0
    %v301 = vsub.f32 0.0, %v298
    %v302 = vmul.f32 %v301, 1.442695
    %v303 = vpow.pop %v302
    %v304 = vadd.f32 %v303, 1.0
    %v305 = vrcp.pop %v304
    %306 = vst [vmem:[#allocation7] sm:$0xff] %v305
    // Predicated region
    $region18: #{tpu_custom_call.1} parent=1 // pred_check
      _
    $region19: #{tpu_custom_call.1} parent=1 // pred_check_branch
      %308 = sbr.rel (0) target = $region21
    $region20: #{tpu_custom_call.1} parent=1 // pred_region
      %s310 = ssub.s32 128, 128
      %311 = vsyncadd [#allocation4], %s310
      %s313 = sshll.u32 [#allocation7], 4
      %s314 = int_to_ptr.vmem [resolvable:$true] %s313
      %316 = dma.vmem_to_hbm [thread:$0]  %s314, 128, %s2, [#allocation4]
    $region21: #{tpu_custom_call.1} parent=1 // pred_fallthru
      _
    // Predicated region
    $region22: #{tpu_custom_call.1} parent=1 // pred_check
      _
    $region23: #{tpu_custom_call.1} parent=1 // pred_check_branch
      %318 = sbr.rel (0) target = $region25
    $region24: #{tpu_custom_call.1} parent=1 // pred_region
      %319 = dma.done [#allocation4], 128
    $region25: #{tpu_custom_call.1} parent=1 // pred_fallthru
      _
    %320 = vsyncpa [#allocation3], 1
    %321 = vsyncpa [#allocation6], 1
    %322 = vsyncpa [#allocation4], 1

</llo_original>
